<compile_context>
chip_gen: v7x
topology: tpu7x:2x2x1
jax: 0.10.0
libtpu: 0.0.40
codegen_flags: <defaults>
</compile_context>

<pallas_src>
import jax
import jax.numpy as jnp
from jax.experimental import pallas as pl
from jax.experimental.pallas import tpu as pltpu

BN_EPS = 1e-5
LANES = 128                       # lane width: pad Cout to a multiple of this


def round_up(x, m):
    return (x + m - 1) // m * m


def _device_kind():
    try:
        return jax.devices()[0].device_kind.lower()
    except Exception:
        return ""


_IS_V5 = "v5" in _device_kind()


def _vmem_limit_bytes():
    """Per-generation scoped-VMEM budget: leave >=32 MiB headroom under the
    physical capacity (64 MiB on v7x, 128 MiB on v5e/v6e), never above 96 MiB."""
    try:
        info = pltpu.get_tpu_info()
        cap = int(getattr(info, "vmem_capacity_bytes", 128 * 1024 * 1024))
    except Exception:
        cap = 128 * 1024 * 1024
    return int(min(max(cap - 32 * 1024 * 1024, 32 * 1024 * 1024),
                   96 * 1024 * 1024))


_VMEM_LIMIT = _vmem_limit_bytes()


def _pick_tn(cpad, k):
    # 256-wide N tiles only pay off when K is deep enough to fill the
    # 2x256^2 v6e/v7x MXU tile; v5e's MXU is 128 wide so keep TN=128 there.
    if (not _IS_V5) and cpad % 256 == 0 and k >= 256:
        return 256
    return 128


def _pick_th(ho, wo, row_cap=128):
    """Largest divisor of Ho so the (TH*Wo, TN) f32 accumulator stays ~64-128KB
    and there are several 'parallel' H tiles for megacore."""
    best = 1
    for d in range(1, ho + 1):
        if ho % d == 0 and d * wo <= row_cap:
            best = d
    return best


# ------------------------------------------------------------------------- #
# Kernel 1: stride-1 3x3 conv as implicit GEMM, fused BN (+ReLU) (+residual)
# ------------------------------------------------------------------------- #
def _make_conv3x3_s1_kernel(th, wo, cin, fold_taps, apply_relu, has_residual):
    """Per grid step: one image x one TH-row tile x one Cout tile."""
    taps = [(i, j) for i in range(3) for j in range(3)]

    def kernel(x_ref, w_ref, s_ref, b_ref, *rest):
        if has_residual:
            r_ref, o_ref = rest
        else:
            (o_ref,) = rest
        tn = o_ref.shape[-1]
        h0 = pl.program_id(1) * th        # first output row of this tile

        if fold_taps:
            # Fold all nine taps into K: one MXU matmul with K = 9*Cin instead
            # of nine K=Cin matmuls and 9x accumulator read-modify-write.
            slabs = [x_ref[0, pl.ds(h0 + i, th), j:j + wo, :]
                     for (i, j) in taps]                       # 9 x (th, wo, cin)
            slab = jnp.concatenate(slabs, axis=-1)             # (th, wo, 9*cin)
            slab = slab.reshape(th * wo, 9 * cin)
            acc = jnp.dot(slab, w_ref[...],
                          preferred_element_type=jnp.float32)
        else:
            # Small / lane-unaligned Cin: per-tap matmuls into a tile-local f32
            # accumulator (small, lives in vregs/VMEM for this tile only).
            acc = jnp.zeros((th * wo, tn), jnp.float32)
            for t, (i, j) in enumerate(taps):
                slab = x_ref[0, pl.ds(h0 + i, th), j:j + wo, :]
                slab = slab.reshape(th * wo, cin)
                acc = acc + jnp.dot(slab, w_ref[t * cin:(t + 1) * cin, :],
                                    preferred_element_type=jnp.float32)

        y = acc * s_ref[...] + b_ref[...]
        if apply_relu:
            y = jnp.maximum(y, 0.0)
        y = y.reshape(th, wo, tn)
        if has_residual:
            y = y + r_ref[0].astype(jnp.float32)
        o_ref[0] = y.astype(o_ref.dtype)

    return kernel


def fused_conv3x3_bn(x_nhwc, w_oihw, scale, bias, *, relu=False, residual=None,
                     compute_dtype=jnp.bfloat16, out_dtype=jnp.float32):
    """3x3 / stride 1 / pad 1 conv + folded BN (+relu) (+residual add).

    x_nhwc  : (N, H, W, Cin_x)  -- Cin_x may already be lane-padded
    w_oihw  : (Cout, Cin_w, 3, 3) with Cin_w <= Cin_x (extra channels -> zero rows)
    residual: optional (N, H, W, Cpad) added after BN
    returns : (N, H, W, Cpad) in `out_dtype`, Cpad = round_up(Cout, 128)
    """
    N, H, W, Cin_x = x_nhwc.shape
    Cout, Cin_w, KH, KW = w_oihw.shape
    assert (KH, KW) == (3, 3) and Cin_w <= Cin_x
    Ho, Wo = H, W
    Hp, Wp = H + 2, W + 2
    Cpad = round_up(Cout, LANES)
    K = KH * KW * Cin_x
    TN = _pick_tn(Cpad, K)
    TH = _pick_th(Ho, Wo)
    # Tap folding concatenates along the lane axis inside the kernel; keep it
    # to lane-aligned Cin so the concat stays on native (8,128) tiles.
    fold_taps = (Cin_x % LANES == 0)

    # Spatial zero-pad only (no HBM im2col expansion); cast MXU operands.
    # TODO(synk): fold this pad into the producing kernel's output window to
    # drop one HBM round trip per conv.
    xp = jnp.pad(x_nhwc.astype(compute_dtype), ((0, 0), (1, 1), (1, 1), (0, 0)))

    # Weights: tap-major (9*Cin_x, Cpad); zero rows for x channels >= Cin_w.
    wt = jnp.transpose(w_oihw, (2, 3, 1, 0))                    # (3,3,Cin_w,Cout)
    wt = jnp.pad(wt.astype(compute_dtype),
                 ((0, 0), (0, 0), (0, Cin_x - Cin_w), (0, Cpad - Cout)))
    wt = wt.reshape(K, Cpad)
    sp = jnp.pad(scale.astype(jnp.float32), (0, Cpad - Cout),
                 constant_values=1.0).reshape(1, Cpad)
    bp = jnp.pad(bias.astype(jnp.float32), (0, Cpad - Cout)).reshape(1, Cpad)

    args = [xp, wt, sp, bp]
    # TODO(synk): for very large spatial maps, switch the x BlockSpec to
    # halo-tiled H windows instead of the whole padded image slab.
    in_specs = [
        pl.BlockSpec((1, Hp, Wp, Cin_x), lambda n, ht, jc: (n, 0, 0, 0)),
        pl.BlockSpec((K, TN), lambda n, ht, jc: (0, jc)),
        pl.BlockSpec((1, TN), lambda n, ht, jc: (0, jc)),
        pl.BlockSpec((1, TN), lambda n, ht, jc: (0, jc)),
    ]
    if residual is not None:
        args.append(residual.astype(jnp.float32))               # (N, Ho, Wo, Cpad)
        in_specs.append(
            pl.BlockSpec((1, TH, Wo, TN), lambda n, ht, jc: (n, ht, 0, jc)))

    kernel = _make_conv3x3_s1_kernel(TH, Wo, Cin_x, fold_taps, relu,
                                     residual is not None)

    isz = jnp.dtype(compute_dtype).itemsize
    flops = 2 * N * Ho * Wo * K * Cpad
    bytes_acc = int(xp.size * isz + wt.size * isz
                    + N * Ho * Wo * Cpad * jnp.dtype(out_dtype).itemsize
                    + (N * Ho * Wo * Cpad * 4 if residual is not None else 0)
                    + 2 * Cpad * 4)

    return pl.pallas_call(
        kernel,
        out_shape=jax.ShapeDtypeStruct((N, Ho, Wo, Cpad), out_dtype),
        grid=(N, Ho // TH, Cpad // TN),
        in_specs=in_specs,
        out_specs=pl.BlockSpec((1, TH, Wo, TN), lambda n, ht, jc: (n, ht, 0, jc)),
        compiler_params=pltpu.CompilerParams(
            dimension_semantics=("parallel", "parallel", "parallel"),
            vmem_limit_bytes=_VMEM_LIMIT),
        cost_estimate=pl.CostEstimate(flops=flops, transcendentals=0,
                                      bytes_accessed=bytes_acc),
    )(*args)


# ------------------------------------------------------------------------- #
# Kernel 2: tiled matmul + folded BN (+ReLU), M/N/K grid, f32 accumulator
# ------------------------------------------------------------------------- #
def _make_matmul_bn_kernel(apply_relu):
    def kernel(p_ref, w_ref, s_ref, b_ref, o_ref, acc_ref):
        @pl.when(pl.program_id(2) == 0)
        def _init():
            acc_ref[...] = jnp.zeros_like(acc_ref)

        acc_ref[...] += jnp.dot(p_ref[...], w_ref[...],
                                preferred_element_type=jnp.float32)

        @pl.when(pl.program_id(2) == pl.num_programs(2) - 1)
        def _finalize():
            y = acc_ref[...] * s_ref[...] + b_ref[...]
            if apply_relu:
                y = jnp.maximum(y, 0.0)
            o_ref[...] = y.astype(o_ref.dtype)

    return kernel


def _pick_tm(m):
    """Minimize padded rows: single tile for small M, else best of 128/256/384/512."""
    if m <= 256:
        return round_up(max(m, 8), 8)
    best_tm, best_mpad = 128, round_up(m, 128)
    for tm in (256, 384, 512):
        mp = round_up(m, tm)
        if mp < best_mpad or (mp == best_mpad and tm > best_tm):
            best_tm, best_mpad = tm, mp
    return best_tm


def _pick_k_tiling(k):
    """Tight K padding: single K step (padded to 8) up to 1024, else 128-granular."""
    if k <= 1024:
        kpad = round_up(max(k, 8), 8)
        return kpad, kpad
    kpad = round_up(k, 128)
    for tk in (512, 256, 128):
        if kpad % tk == 0:
            return kpad, tk
    return kpad, 128


def fused_matmul_bn(x_mat, w_mat, scale, bias, *, relu=False,
                    compute_dtype=jnp.bfloat16, out_dtype=jnp.float32):
    """(x_mat @ w_mat) * scale + bias [+relu], lane-dense 128-padded output.

    x_mat : (M, K)     w_mat : (K, Cout)
    returns (M, Cpad) in out_dtype, Cpad = Cout rounded up to 128 lanes.
    """
    M, K = x_mat.shape
    Cout = w_mat.shape[1]
    Cpad = round_up(Cout, LANES)

    TN = _pick_tn(Cpad, K)
    Kpad, TK = _pick_k_tiling(K)
    TM = _pick_tm(M)
    Mpad = round_up(M, TM)

    xp = jnp.pad(x_mat.astype(compute_dtype), ((0, Mpad - M), (0, Kpad - K)))
    wp = jnp.pad(w_mat.astype(compute_dtype), ((0, Kpad - K), (0, Cpad - Cout)))
    sp = jnp.pad(scale.astype(jnp.float32), (0, Cpad - Cout),
                 constant_values=1.0).reshape(1, Cpad)
    bp = jnp.pad(bias.astype(jnp.float32), (0, Cpad - Cout)).reshape(1, Cpad)

    isz = jnp.dtype(compute_dtype).itemsize
    flops = 2 * Mpad * Kpad * Cpad
    bytes_acc = int(xp.size * isz + wp.size * isz
                    + Mpad * Cpad * jnp.dtype(out_dtype).itemsize + 2 * Cpad * 4)

    out = pl.pallas_call(
        _make_matmul_bn_kernel(relu),
        out_shape=jax.ShapeDtypeStruct((Mpad, Cpad), out_dtype),
        grid=(Mpad // TM, Cpad // TN, Kpad // TK),
        in_specs=[
            pl.BlockSpec((TM, TK), lambda i, j, k: (i, k)),
            pl.BlockSpec((TK, TN), lambda i, j, k: (k, j)),
            pl.BlockSpec((1, TN), lambda i, j, k: (0, j)),
            pl.BlockSpec((1, TN), lambda i, j, k: (0, j)),
        ],
        out_specs=pl.BlockSpec((TM, TN), lambda i, j, k: (i, j)),
        scratch_shapes=[pltpu.VMEM((TM, TN), jnp.float32)],
        compiler_params=pltpu.CompilerParams(
            dimension_semantics=("parallel", "parallel", "arbitrary"),
            vmem_limit_bytes=_VMEM_LIMIT),
        cost_estimate=pl.CostEstimate(flops=flops, transcendentals=0,
                                      bytes_accessed=bytes_acc),
    )(xp, wp, sp, bp)
    return out if Mpad == M else out[:M]      # rows trimmed, channels left padded


# ------------------------------- JAX glue ---------------------------------- #
def im2col(x_nhwc, kh, kw, stride, pad):
    """Extract conv patches. Returns (N*Ho*Wo, kh*kw*C) and (N, Ho, Wo)."""
    N, H, W, C = x_nhwc.shape
    xp = jnp.pad(x_nhwc, ((0, 0), (pad, pad), (pad, pad), (0, 0)))
    Ho = (H + 2 * pad - kh) // stride + 1
    Wo = (W + 2 * pad - kw) // stride + 1
    cols = []
    for i in range(kh):
        for j in range(kw):
            cols.append(xp[:, i:i + stride * Ho:stride,
                           j:j + stride * Wo:stride, :])
    patches = jnp.concatenate(cols, axis=-1)          # (N, Ho, Wo, kh*kw*C)
    return patches.reshape(N * Ho * Wo, kh * kw * C), (N, Ho, Wo)


def weight_to_matrix(w_oihw):
    """(Cout, Cin, KH, KW) -> (KH*KW*Cin, Cout), matching im2col ordering."""
    Cout, Cin, KH, KW = w_oihw.shape
    return jnp.transpose(w_oihw, (2, 3, 1, 0)).reshape(KH * KW * Cin, Cout)


def fold_bn(bn_params):
    gamma, beta, mean, var = bn_params
    scale = gamma / jnp.sqrt(var + BN_EPS)
    bias = beta - mean * scale
    return scale, bias


def init_basic_block(key, in_ch, out_ch):
    downsample = in_ch != out_ch
    ks = jax.random.split(key, 8)

    def bn_init(k, c):
        k1, k2, k3, k4 = jax.random.split(k, 4)
        gamma = 1.0 + 0.1 * jax.random.normal(k1, (c,), jnp.float32)
        beta = 0.1 * jax.random.normal(k2, (c,), jnp.float32)
        mean = 0.1 * jax.random.normal(k3, (c,), jnp.float32)
        var = jnp.abs(1.0 + 0.1 * jax.random.normal(k4, (c,), jnp.float32))
        return (gamma, beta, mean, var)

    params = {
        "w1": 0.1 * jax.random.normal(ks[0], (out_ch, in_ch, 3, 3), jnp.float32),
        "bn1": bn_init(ks[1], out_ch),
        "w2": 0.1 * jax.random.normal(ks[2], (out_ch, out_ch, 3, 3), jnp.float32),
        "bn2": bn_init(ks[3], out_ch),
    }
    if downsample:
        params["wd"] = 0.1 * jax.random.normal(
            ks[4], (out_ch, in_ch, 1, 1), jnp.float32)
        params["bnd"] = bn_init(ks[5], out_ch)
    return params


def basic_block_forward(x_nchw, params, in_ch, out_ch, *,
                        compute_dtype=jnp.bfloat16):
    """Pallas implementation of BasicBlock.forward (input/output NCHW).

    bf16 MXU operands are the default (f32 accumulation + f32 epilogue kept);
    pass compute_dtype=jnp.float32 for a tight match against an f32 reference.
    """
    downsample = in_ch != out_ch
    N, _, H, W = x_nchw.shape

    x = jnp.transpose(x_nchw, (0, 2, 3, 1)).astype(jnp.float32)       # NHWC
    Cpad = round_up(out_ch, LANES)
    s1, b1 = fold_bn(params["bn1"])
    s2, b2 = fold_bn(params["bn2"])

    if downsample:
        # conv1: 3x3 stride-2 lowered to a tiled matmul on im2col patches.
        # TODO(synk): replace the im2col for strided 3x3 convs with a
        # space-to-depth implicit GEMM to drop the remaining ~2.25x expansion.
        p1, (_, Ho, Wo) = im2col(x, 3, 3, 2, 1)
        y1 = fused_matmul_bn(p1, weight_to_matrix(params["w1"]), s1, b1,
                             relu=True, compute_dtype=compute_dtype,
                             out_dtype=compute_dtype)
        y1 = y1.reshape(N, Ho, Wo, Cpad)            # stays channel-padded

        # Residual branch: 1x1 stride-2 conv + BN == decimate + plain matmul.
        sd, bd = fold_bn(params["bnd"])
        x_dec = x[:, ::2, ::2, :].reshape(N * Ho * Wo, in_ch)
        wdm = params["wd"].reshape(out_ch, in_ch).T                    # (Cin, Cout)
        ident = fused_matmul_bn(x_dec, wdm, sd, bd, relu=False,
                                compute_dtype=compute_dtype,
                                out_dtype=jnp.float32)
        ident = ident.reshape(N, Ho, Wo, Cpad)
    else:
        Ho, Wo = H, W
        # conv1: stride-1 3x3 implicit GEMM, no HBM im2col.
        y1 = fused_conv3x3_bn(x, params["w1"], s1, b1, relu=True,
                              compute_dtype=compute_dtype,
                              out_dtype=compute_dtype)                 # (N,H,W,Cpad)
        # Identity residual; no-op pad when in_ch is already lane-aligned.
        # TODO(synk): for in_ch not a multiple of 128 this is one extra HBM copy.
        ident = (x if in_ch == Cpad else
                 jnp.pad(x, ((0, 0), (0, 0), (0, 0), (0, Cpad - in_ch))))

    # conv2 (stride-1 3x3) + bn2 + residual add, fused in one kernel.  conv2
    # consumes the channel-padded y1 directly (its weight Cin is zero-padded),
    # so no channel slice/pad copy happens between conv1 and conv2.
    # NOTE: the reference module returns x + output with NO post-add ReLU.
    out = fused_conv3x3_bn(y1, params["w2"], s2, b2, relu=False,
                           residual=ident, compute_dtype=compute_dtype,
                           out_dtype=jnp.float32)                      # (N,Ho,Wo,Cpad)
    out = out[..., :out_ch]
    return jnp.transpose(out, (0, 3, 1, 2))                            # NCHW


# --------------------------- pure-JAX reference ----------------------------- #
def ref_forward(x, params, in_ch, out_ch):
    downsample = in_ch != out_ch
    stride = 2 if downsample else 1

    def conv(x, w, s, p):
        return jax.lax.conv_general_dilated(
            x, w, (s, s), ((p, p), (p, p)),
            dimension_numbers=("NCHW", "OIHW", "NCHW"))

    def bn(x, bnp):
        g, b, m, v = bnp
        sc = (g / jnp.sqrt(v + BN_EPS))[None, :, None, None]
        return (x - m[None, :, None, None]) * sc + b[None, :, None, None]

    o = jax.nn.relu(bn(conv(x, params["w1"], stride, 1), params["bn1"]))
    o = bn(conv(o, params["w2"], 1, 1), params["bn2"])
    ident = (bn(conv(x, params["wd"], stride, 0), params["bnd"])
             if downsample else x)
    return ident + o


# ----------------------------------- main ----------------------------------- #
if __name__ == "__main__":
    key = jax.random.PRNGKey(0)
    kx, kp1, kp2 = jax.random.split(key, 3)

    x = jax.random.normal(kx, (2, 4, 16, 16), jnp.float32)   # NCHW

    # Case 1: downsample path (in_ch != out_ch -> stride 2 + 1x1 conv branch),
    # f32 operands for a tight reference match.
    params_ds = init_basic_block(kp1, in_ch=4, out_ch=8)
    out_ds = jax.block_until_ready(
        basic_block_forward(x, params_ds, in_ch=4, out_ch=8,
                            compute_dtype=jnp.float32))
    ref_ds = ref_forward(x, params_ds, 4, 8)
    assert out_ds.shape == (2, 8, 8, 8), out_ds.shape
    assert jnp.allclose(out_ds, ref_ds, atol=1e-4, rtol=1e-4)

    # Case 2: identity path (in_ch == out_ch -> stride 1, plain residual).
    params_id = init_basic_block(kp2, in_ch=4, out_ch=4)
    out_id = jax.block_until_ready(
        basic_block_forward(x, params_id, in_ch=4, out_ch=4,
                            compute_dtype=jnp.float32))
    ref_id = ref_forward(x, params_id, 4, 4)
    assert out_id.shape == (2, 4, 16, 16), out_id.shape
    assert jnp.allclose(out_id, ref_id, atol=1e-4, rtol=1e-4)

    # Case 3: default bf16 MXU-operand path (production config), looser tol.
    out_bf = jax.block_until_ready(
        basic_block_forward(x, params_ds, in_ch=4, out_ch=8))
    assert jnp.allclose(out_bf, ref_ds, atol=5e-2, rtol=5e-2)

    print("KERNEL_OK")
</pallas_src>

<mosaic_0001>
module attributes {stable_mosaic.version = 11 : i64} {
  func.func @kernel(%arg0: i32, %arg1: i32, %arg2: i32, %arg3: memref<128x40xf32, #tpu.memory_space<vmem>>, %arg4: memref<40x128xf32, #tpu.memory_space<vmem>>, %arg5: memref<1x128xf32, #tpu.memory_space<vmem>>, %arg6: memref<1x128xf32, #tpu.memory_space<vmem>>, %arg7: memref<128x128xf32, #tpu.memory_space<vmem>>, %arg8: memref<128x128xf32, #tpu.memory_space<vmem>>) attributes {dimension_semantics = [#tpu.dimension_semantics<parallel>, #tpu.dimension_semantics<parallel>, #tpu.dimension_semantics<arbitrary>], iteration_bounds = array<i64: 1, 1, 1>, scalar_prefetch = 0 : i64, scratch_operands = 1 : i64, tpu.core_type = #tpu.core_type<tc>, window_params = [{transform_indices = @transform_0, window_bounds = array<i64: 128, 40>}, {transform_indices = @transform_1, window_bounds = array<i64: 40, 128>}, {transform_indices = @transform_2, window_bounds = array<i64: 1, 128>}, {transform_indices = @transform_3, window_bounds = array<i64: 1, 128>}, {transform_indices = @transform_4, window_bounds = array<i64: 128, 128>}]} {
    %c0_i32 = arith.constant 0 : i32
    %0 = arith.cmpi eq, %arg2, %c0_i32 : i32
    %1 = arith.extui %0 : i1 to i32
    %c0_i32_0 = arith.constant 0 : i32
    %2 = arith.cmpi ne, %1, %c0_i32_0 : i32
    scf.if %2 {
      %cst_10 = arith.constant 0.000000e+00 : f32
      %12 = vector.broadcast %cst_10 : f32 to vector<128x128xf32>
      %c0_11 = arith.constant 0 : index
      %c0_12 = arith.constant 0 : index
      %13 = vector.load %arg8[%c0_11, %c0_12] : memref<128x128xf32, #tpu.memory_space<vmem>>, vector<128x128xf32>
      tpu.vector_store %arg8[%c0_11, %c0_12], %12 {strides = array<i32>} : memref<128x128xf32, #tpu.memory_space<vmem>>, vector<128x128xf32>,
    } else {
    }
    %c0 = arith.constant 0 : index
    %c0_1 = arith.constant 0 : index
    %3 = vector.load %arg8[%c0, %c0_1] : memref<128x128xf32, #tpu.memory_space<vmem>>, vector<128x128xf32>
    %c0_2 = arith.constant 0 : index
    %c0_3 = arith.constant 0 : index
    %4 = vector.load %arg3[%c0_2, %c0_3] : memref<128x40xf32, #tpu.memory_space<vmem>>, vector<128x40xf32>
    %c0_4 = arith.constant 0 : index
    %c0_5 = arith.constant 0 : index
    %5 = vector.load %arg4[%c0_4, %c0_5] : memref<40x128xf32, #tpu.memory_space<vmem>>, vector<40x128xf32>
    %cst = arith.constant dense<0.000000e+00> : vector<128x128xf32>
    %6 = tpu.matmul %4, %5, %cst {dimension_numbers = #tpu.dot_dimension_numbers<[1], [0], [0], [1], [0, 0, 1, 1], [], []>} : vector<128x40xf32>, vector<40x128xf32>, vector<128x128xf32> -> vector<128x128xf32>
    %7 = arith.addf %3, %6 : vector<128x128xf32>
    %c0_6 = arith.constant 0 : index
    %c0_7 = arith.constant 0 : index
    %8 = vector.load %arg8[%c0_6, %c0_7] : memref<128x128xf32, #tpu.memory_space<vmem>>, vector<128x128xf32>
    tpu.vector_store %arg8[%c0_6, %c0_7], %7 {strides = array<i32>} : memref<128x128xf32, #tpu.memory_space<vmem>>, vector<128x128xf32>,
    %c0_i32_8 = arith.constant 0 : i32
    %9 = arith.cmpi eq, %arg2, %c0_i32_8 : i32
    %10 = arith.extui %9 : i1 to i32
    %c0_i32_9 = arith.constant 0 : i32
    %11 = arith.cmpi ne, %10, %c0_i32_9 : i32
    scf.if %11 {
      %c0_10 = arith.constant 0 : index
      %c0_11 = arith.constant 0 : index
      %12 = vector.load %arg8[%c0_10, %c0_11] : memref<128x128xf32, #tpu.memory_space<vmem>>, vector<128x128xf32>
      %c0_12 = arith.constant 0 : index
      %c0_13 = arith.constant 0 : index
      %13 = vector.load %arg5[%c0_12, %c0_13] : memref<1x128xf32, #tpu.memory_space<vmem>>, vector<1x128xf32>
      %14 = vector.broadcast %13 : vector<1x128xf32> to vector<128x128xf32>
      %15 = arith.mulf %12, %14 : vector<128x128xf32>
      %c0_14 = arith.constant 0 : index
      %c0_15 = arith.constant 0 : index
      %16 = vector.load %arg6[%c0_14, %c0_15] : memref<1x128xf32, #tpu.memory_space<vmem>>, vector<1x128xf32>
      %17 = vector.broadcast %16 : vector<1x128xf32> to vector<128x128xf32>
      %18 = arith.addf %15, %17 : vector<128x128xf32>
      %cst_16 = arith.constant 0.000000e+00 : f32
      %19 = vector.broadcast %cst_16 : f32 to vector<128x128xf32>
      %20 = arith.maximumf %18, %19 : vector<128x128xf32>
      %c0_17 = arith.constant 0 : index
      %c0_18 = arith.constant 0 : index
      %21 = vector.load %arg7[%c0_17, %c0_18] : memref<128x128xf32, #tpu.memory_space<vmem>>, vector<128x128xf32>
      tpu.vector_store %arg7[%c0_17, %c0_18], %20 {strides = array<i32>} : memref<128x128xf32, #tpu.memory_space<vmem>>, vector<128x128xf32>,
    } else {
    }
    return
  }
  func.func @transform_0(%arg0: i32, %arg1: i32, %arg2: i32) -> (i32, i32) {
    %c0_i32 = arith.constant 0 : i32
    return %arg0, %arg2 : i32, i32
  }
  func.func @transform_1(%arg0: i32, %arg1: i32, %arg2: i32) -> (i32, i32) {
    %c0_i32 = arith.constant 0 : i32
    return %arg2, %arg1 : i32, i32
  }
  func.func @transform_2(%arg0: i32, %arg1: i32, %arg2: i32) -> (i32, i32) {
    %c0_i32 = arith.constant 0 : i32
    %c0_i32_0 = arith.constant 0 : i32
    return %c0_i32, %arg1 : i32, i32
  }
  func.func @transform_3(%arg0: i32, %arg1: i32, %arg2: i32) -> (i32, i32) {
    %c0_i32 = arith.constant 0 : i32
    %c0_i32_0 = arith.constant 0 : i32
    return %c0_i32, %arg1 : i32, i32
  }
  func.func @transform_4(%arg0: i32, %arg1: i32, %arg2: i32) -> (i32, i32) {
    %c0_i32 = arith.constant 0 : i32
    return %arg0, %arg1 : i32, i32
  }
}

</mosaic_0001>

<llo_original>
// kernel: tpu_custom_call.1
$region0: #{tpu_custom_call.1}
  #allocation0 [shape = 'u32[]', space=smem, size = 0x4, offset = 0x4, fixed_abs, tag = 'smem constant byte address 0x4 - core index']
  #allocation1 [shape = 'u32[144,128]{1,0:T(1,128)}', space=vmem, size = 0x12000, scoped, tag = 'internal scratch']
  #allocation2 [shape = 'f32[128,128]{1,0:T(8,128)}', space=vmem, size = 0x10000, scoped, tag = 'scratch operand']
  %s0 = inlined_call_operand.hbm [shape: f32[128,40], index: 0, kind: input, shape index: {}]
  %s1 = inlined_call_operand.hbm [shape: f32[40,128], index: 1, kind: input, shape index: {}]
  %s2 = inlined_call_operand.hbm [shape: f32[1,128], index: 2, kind: input, shape index: {}]
  %s3 = inlined_call_operand.hbm [shape: f32[1,128], index: 3, kind: input, shape index: {}]
  %s4 = inlined_call_operand.hbm [shape: f32[128,128], index: 4, kind: output, shape index: {}]
  %s5 = sld [smem:[#allocation0]]
  $region50: #{tpu_custom_call.1} parent=0
    _
  %s7 = ssub.s32 1, %s5
  %s8 = scalar_select 0, %s7, %s5
  $region1: #{tpu_custom_call.1} parent=0
    #allocation3 [shape = 'u8[65536]{0}', space=vmem, size = 0x10000, scoped, tag = 'input window, operand 0, single buffered']
    #allocation4 [shape = 's32[1]{0}', space=sflag, size = 0x4, scoped, tag = 'scoped memory for tpu_custom_call.1']
    #allocation5 [shape = 's32[1]{0}', space=sflag, size = 0x4, scoped, tag = 'scoped memory for tpu_custom_call.1']
    #allocation6 [shape = 'u8[20480]{0}', space=vmem, size = 0x5000, scoped, tag = 'input window, operand 1, single buffered']
    #allocation7 [shape = 's32[1]{0}', space=sflag, size = 0x4, scoped, tag = 'scoped memory for tpu_custom_call.1']
    #allocation8 [shape = 'u8[512]{0}', space=vmem, size = 0x400, scoped, tag = 'input window, operand 2, single buffered']
    #allocation9 [shape = 'u8[512]{0}', space=vmem, size = 0x400, scoped, tag = 'input window, operand 3, single buffered']
    #allocation10 [shape = 's32[1]{0}', space=sflag, size = 0x4, scoped, tag = 'scoped memory for tpu_custom_call.1']
    #allocation11 [shape = 'u8[65536]{0}', space=vmem, size = 0x10000, scoped, tag = 'output window, operand 0, single buffered']
    %9 = vsyncpa [#allocation4], 0
    %10 = vsyncpa [#allocation7], 0
    %11 = vsyncpa [#allocation10], 0
    %12 = vsyncpa [#allocation5], 0
    // Predicated region
    $region2: #{tpu_custom_call.1} parent=1 // pred_check
      _
    $region3: #{tpu_custom_call.1} parent=1 // pred_check_branch
      %14 = sbr.rel (0) target = $region5
    $region4: #{tpu_custom_call.1} parent=1 // pred_region
      %s16 = ssub.s32 2048, 2048
      %17 = vsyncadd [#allocation4], %s16
      %s18 = sshll.u32 [#allocation3], 4
      %s19 = int_to_ptr.vmem [resolvable:$true] %s18
      %24 = dma.hbm_to_vmem [thread:$0]  %s0, 2048, %s19, [#allocation4], 128, 128, 8
    $region5: #{tpu_custom_call.1} parent=1 // pred_fallthru
      _
    // Predicated region
    $region6: #{tpu_custom_call.1} parent=1 // pred_check
      _
    $region7: #{tpu_custom_call.1} parent=1 // pred_check_branch
      %26 = sbr.rel (0) target = $region9
    $region8: #{tpu_custom_call.1} parent=1 // pred_region
      %s28 = ssub.s32 640, 640
      %29 = vsyncadd [#allocation7], %s28
      %s30 = sshll.u32 [#allocation6], 4
      %s31 = int_to_ptr.vmem [resolvable:$true] %s30
      %36 = dma.hbm_to_vmem [thread:$0]  %s1, 640, %s31, [#allocation7], 128, 128, 8
    $region9: #{tpu_custom_call.1} parent=1 // pred_fallthru
      _
    // Predicated region
    $region10: #{tpu_custom_call.1} parent=1 // pred_check
      _
    $region11: #{tpu_custom_call.1} parent=1 // pred_check_branch
      %38 = sbr.rel (0) target = $region13
    $region12: #{tpu_custom_call.1} parent=1 // pred_region
      %s40 = ssub.s32 16, 16
      %41 = vsyncadd [#allocation7], %s40
      %s43 = sshll.u32 [#allocation8], 4
      %s44 = int_to_ptr.vmem [resolvable:$true] %s43
      %46 = dma.hbm_to_vmem [thread:$0]  %s2, 16, %s44, [#allocation7]
    $region13: #{tpu_custom_call.1} parent=1 // pred_fallthru
      _
    // Predicated region
    $region14: #{tpu_custom_call.1} parent=1 // pred_check
      _
    $region15: #{tpu_custom_call.1} parent=1 // pred_check_branch
      %48 = sbr.rel (0) target = $region17
    $region16: #{tpu_custom_call.1} parent=1 // pred_region
      %s50 = ssub.s32 16, 16
      %51 = vsyncadd [#allocation10], %s50
      %s53 = sshll.u32 [#allocation9], 4
      %s54 = int_to_ptr.vmem [resolvable:$true] %s53
      %56 = dma.hbm_to_vmem [thread:$0]  %s3, 16, %s54, [#allocation10]
    $region17: #{tpu_custom_call.1} parent=1 // pred_fallthru
      _
    // Predicated region
    $region18: #{tpu_custom_call.1} parent=1 // pred_check
      _
    $region19: #{tpu_custom_call.1} parent=1 // pred_check_branch
      %58 = sbr.rel (0) target = $region21
    $region20: #{tpu_custom_call.1} parent=1 // pred_region
      %59 = dma.done [#allocation4], 2048
    $region21: #{tpu_custom_call.1} parent=1 // pred_fallthru
      _
    // Predicated region
    $region22: #{tpu_custom_call.1} parent=1 // pred_check
      _
    $region23: #{tpu_custom_call.1} parent=1 // pred_check_branch
      %61 = sbr.rel (0) target = $region25
    $region24: #{tpu_custom_call.1} parent=1 // pred_region
      %62 = dma.done [#allocation7], 640
    $region25: #{tpu_custom_call.1} parent=1 // pred_fallthru
      _
    // Predicated region
    $region26: #{tpu_custom_call.1} parent=1 // pred_check
      _
    $region27: #{tpu_custom_call.1} parent=1 // pred_check_branch
      %64 = sbr.rel (0) target = $region29
    $region28: #{tpu_custom_call.1} parent=1 // pred_region
      %65 = dma.done [#allocation7], 16
    $region29: #{tpu_custom_call.1} parent=1 // pred_fallthru
      _
    // Predicated region
    $region30: #{tpu_custom_call.1} parent=1 // pred_check
      _
    $region31: #{tpu_custom_call.1} parent=1 // pred_check_branch
      %67 = sbr.rel (0) target = $region33
    $region32: #{tpu_custom_call.1} parent=1 // pred_region
      %68 = dma.done [#allocation10], 16
    $region33: #{tpu_custom_call.1} parent=1 // pred_fallthru
      _
    %p69 = scmp.eq.s32.totalorder 0, 0
    // Predicated region
    $region34: #{tpu_custom_call.1} parent=1 // pred_check
      %p70 = pneg %p69
    $region35: #{tpu_custom_call.1} parent=1 // pred_check_branch
      %72 = sbr.rel (%p70) target = $region37
    $region36: #{tpu_custom_call.1} parent=1 // pred_region
      %73 = vst [vmem:[#allocation2] sm:$0xff] 0.0
      %74 = vst [vmem:[#allocation2 + $0x8] sm:$0xff] 0.0
      %75 = vst [vmem:[#allocation2 + $0x10] sm:$0xff] 0.0
      %76 = vst [vmem:[#allocation2 + $0x18] sm:$0xff] 0.0
      %77 = vst [vmem:[#allocation2 + $0x20] sm:$0xff] 0.0
      %78 = vst [vmem:[#allocation2 + $0x28] sm:$0xff] 0.0
      %79 = vst [vmem:[#allocation2 + $0x30] sm:$0xff] 0.0
      %80 = vst [vmem:[#allocation2 + $0x38] sm:$0xff] 0.0
      %81 = vst [vmem:[#allocation2 + $0x40] sm:$0xff] 0.0
      %82 = vst [vmem:[#allocation2 + $0x48] sm:$0xff] 0.0
      %83 = vst [vmem:[#allocation2 + $0x50] sm:$0xff] 0.0
      %84 = vst [vmem:[#allocation2 + $0x58] sm:$0xff] 0.0
      %85 = vst [vmem:[#allocation2 + $0x60] sm:$0xff] 0.0
      %86 = vst [vmem:[#allocation2 + $0x68] sm:$0xff] 0.0
      %87 = vst [vmem:[#allocation2 + $0x70] sm:$0xff] 0.0
      %88 = vst [vmem:[#allocation2 + $0x78] sm:$0xff] 0.0
    $region37: #{tpu_custom_call.1} parent=1 // pred_fallthru
      _
    %v89 = vld [vmem:[#allocation2] sm:$0xff]
    %v90 = vld [vmem:[#allocation2 + $0x8] sm:$0xff]
    %v91 = vld [vmem:[#allocation2 + $0x10] sm:$0xff]
    %v92 = vld [vmem:[#allocation2 + $0x18] sm:$0xff]
    %v93 = vld [vmem:[#allocation2 + $0x20] sm:$0xff]
    %v94 = vld [vmem:[#allocation2 + $0x28] sm:$0xff]
    %v95 = vld [vmem:[#allocation2 + $0x30] sm:$0xff]
    %v96 = vld [vmem:[#allocation2 + $0x38] sm:$0xff]
    %v97 = vld [vmem:[#allocation2 + $0x40] sm:$0xff]
    %v98 = vld [vmem:[#allocation2 + $0x48] sm:$0xff]
    %v99 = vld [vmem:[#allocation2 + $0x50] sm:$0xff]
    %v100 = vld [vmem:[#allocation2 + $0x58] sm:$0xff]
    %v101 = vld [vmem:[#allocation2 + $0x60] sm:$0xff]
    %v102 = vld [vmem:[#allocation2 + $0x68] sm:$0xff]
    %v103 = vld [vmem:[#allocation2 + $0x70] sm:$0xff]
    %v104 = vld [vmem:[#allocation2 + $0x78] sm:$0xff]
    %v105 = vld [vmem:[#allocation3] sm:$0xff]
    %v106 = vld [vmem:[#allocation3 + $0x8] sm:$0xff]
    %v107 = vld [vmem:[#allocation3 + $0x10] sm:$0xff]
    %v108 = vld [vmem:[#allocation3 + $0x18] sm:$0xff]
    %v109 = vld [vmem:[#allocation3 + $0x20] sm:$0xff]
    %v110 = vld [vmem:[#allocation3 + $0x28] sm:$0xff]
    %v111 = vld [vmem:[#allocation3 + $0x30] sm:$0xff]
    %v112 = vld [vmem:[#allocation3 + $0x38] sm:$0xff]
    %v113 = vld [vmem:[#allocation3 + $0x40] sm:$0xff]
    %v114 = vld [vmem:[#allocation3 + $0x48] sm:$0xff]
    %v115 = vld [vmem:[#allocation3 + $0x50] sm:$0xff]
    %v116 = vld [vmem:[#allocation3 + $0x58] sm:$0xff]
    %v117 = vld [vmem:[#allocation3 + $0x60] sm:$0xff]
    %v118 = vld [vmem:[#allocation3 + $0x68] sm:$0xff]
    %v119 = vld [vmem:[#allocation3 + $0x70] sm:$0xff]
    %v120 = vld [vmem:[#allocation3 + $0x78] sm:$0xff]
    %v121 = vld [vmem:[#allocation6] sm:$0xff]
    %v122 = vld [vmem:[#allocation6 + $0x8] sm:$0xff]
    %v123 = vld [vmem:[#allocation6 + $0x10] sm:$0xff]
    %v124 = vld [vmem:[#allocation6 + $0x18] sm:$0xff]
    %v125 = vld [vmem:[#allocation6 + $0x20] sm:$0xff]
    %vm126 = vcmask 326656
    %v128 = vsel %vm126, %v105, 0
    %v131 = vsel %vm126, %v106, 0
    %v134 = vsel %vm126, %v107, 0
    %v137 = vsel %vm126, %v108, 0
    %v140 = vsel %vm126, %v109, 0
    %v143 = vsel %vm126, %v110, 0
    %v146 = vsel %vm126, %v111, 0
    %v149 = vsel %vm126, %v112, 0
    %v152 = vsel %vm126, %v113, 0
    %v155 = vsel %vm126, %v114, 0
    %v158 = vsel %vm126, %v115, 0
    %v161 = vsel %vm126, %v116, 0
    %v164 = vsel %vm126, %v117, 0
    %v167 = vsel %vm126, %v118, 0
    %v170 = vsel %vm126, %v119, 0
    %v173 = vsel %vm126, %v120, 0
    %175 = vmatprep.subr.mxu0 0.0
    %176 = vmatpush1.msra.mxu0 %v121
    %177 = vmatprep.subr.mxu0 0.0
    %178 = vmatpush1.msra.mxu0 %v122
    %179 = vmatprep.subr.mxu0 0.0
    %180 = vmatpush1.msra.mxu0 %v123
    %181 = vmatprep.subr.mxu0 0.0
    %182 = vmatpush1.msra.mxu0 %v124
    %183 = vmatprep.subr.mxu0 0.0
    %184 = vmatpush1.msra.mxu0 %v125
    %185 = vmatprep.subr.mxu0 0.0
    %186 = vmatpush1.msra.mxu0 0.0
    %187 = vmatprep.subr.mxu0 0.0
    %188 = vmatpush1.msra.mxu0 0.0
    %189 = vmatprep.subr.mxu0 0.0
    %190 = vmatpush1.msra.mxu0 0.0
    %191 = vmatprep.subr.mxu0 0.0
    %192 = vmatpush1.msra.mxu0 0.0
    %193 = vmatprep.subr.mxu0 0.0
    %194 = vmatpush1.msra.mxu0 0.0
    %195 = vmatprep.subr.mxu0 0.0
    %196 = vmatpush1.msra.mxu0 0.0
    %197 = vmatprep.subr.mxu0 0.0
    %198 = vmatpush1.msra.mxu0 0.0
    %199 = vmatprep.subr.mxu0 0.0
    %200 = vmatpush1.msra.mxu0 0.0
    %201 = vmatprep.subr.mxu0 0.0
    %202 = vmatpush1.msra.mxu0 0.0
    %203 = vmatprep.subr.mxu0 0.0
    %204 = vmatpush1.msra.mxu0 0.0
    %205 = vmatprep.subr.mxu0 0.0
    %206 = vmatpush1.msra.mxu0 0.0
    %207 = vmatprep.subr.mxu0 0.0
    %208 = vmatpush1.msra.mxu0 0.0
    %209 = vmatprep.subr.mxu0 0.0
    %210 = vmatpush1.msra.mxu0 0.0
    %211 = vmatprep.subr.mxu0 0.0
    %212 = vmatpush1.msra.mxu0 0.0
    %213 = vmatprep.subr.mxu0 0.0
    %214 = vmatpush1.msra.mxu0 0.0
    %215 = vmatprep.subr.mxu0 0.0
    %216 = vmatpush1.msra.mxu0 0.0
    %217 = vmatprep.subr.mxu0 0.0
    %218 = vmatpush1.msra.mxu0 0.0
    %219 = vmatprep.subr.mxu0 0.0
    %220 = vmatpush1.msra.mxu0 0.0
    %221 = vmatprep.subr.mxu0 0.0
    %222 = vmatpush1.msra.mxu0 0.0
    %223 = vmatprep.subr.mxu0 0.0
    %224 = vmatpush1.msra.mxu0 0.0
    %225 = vmatprep.subr.mxu0 0.0
    %226 = vmatpush1.msra.mxu0 0.0
    %227 = vmatprep.subr.mxu0 0.0
    %228 = vmatpush1.msra.mxu0 0.0
    %229 = vmatprep.subr.mxu0 0.0
    %230 = vmatpush1.msra.mxu0 0.0
    %231 = vmatprep.subr.mxu0 0.0
    %232 = vmatpush1.msra.mxu0 0.0
    %233 = vmatprep.subr.mxu0 0.0
    %234 = vmatpush1.msra.mxu0 0.0
    %235 = vmatprep.subr.mxu0 0.0
    %236 = vmatpush1.msra.mxu0 0.0
    %237 = vmatprep.subr.mxu0 0.0
    %238 = vmatpush1.msra.mxu0 0.0
    %239 = vmatprep.mubr.f32.mxu0 0.0
    %240 = vmatmul.mubr.f32.gmra.mrb[0].mxu0 %v128
    %v241 = vpop.f32.mrb[0].mxu0
    %v242 = vadd.f32 0.0, %v241
    %v243 = vpop.f32.mrb[0].mxu0
    %244 = vmatprep.mubr.f32.mxu0 0.0
    %245 = vmatmul.mubr.f32.gmra.mrb[0].mxu0 %v131
    %v246 = vpop.f32.mrb[0].mxu0
    %v247 = vadd.f32 0.0, %v246
    %v248 = vpop.f32.mrb[0].mxu0
    %249 = vmatprep.mubr.f32.mxu0 0.0
    %250 = vmatmul.mubr.f32.gmra.mrb[0].mxu0 %v134
    %v251 = vpop.f32.mrb[0].mxu0
    %v252 = vadd.f32 0.0, %v251
    %v253 = vpop.f32.mrb[0].mxu0
    %254 = vmatprep.mubr.f32.mxu0 0.0
    %255 = vmatmul.mubr.f32.gmra.mrb[0].mxu0 %v137
    %v256 = vpop.f32.mrb[0].mxu0
    %v257 = vadd.f32 0.0, %v256
    %v258 = vpop.f32.mrb[0].mxu0
    %259 = vmatprep.mubr.f32.mxu0 0.0
    %260 = vmatmul.mubr.f32.gmra.mrb[0].mxu0 %v140
    %v261 = vpop.f32.mrb[0].mxu0
    %v262 = vadd.f32 0.0, %v261
    %v263 = vpop.f32.mrb[0].mxu0
    %264 = vmatprep.mubr.f32.mxu0 0.0
    %265 = vmatmul.mubr.f32.gmra.mrb[0].mxu0 %v143
    %v266 = vpop.f32.mrb[0].mxu0
    %v267 = vadd.f32 0.0, %v266
    %v268 = vpop.f32.mrb[0].mxu0
    %269 = vmatprep.mubr.f32.mxu0 0.0
    %270 = vmatmul.mubr.f32.gmra.mrb[0].mxu0 %v146
    %v271 = vpop.f32.mrb[0].mxu0
    %v272 = vadd.f32 0.0, %v271
    %v273 = vpop.f32.mrb[0].mxu0
    %274 = vmatprep.mubr.f32.mxu0 0.0
    %275 = vmatmul.mubr.f32.gmra.mrb[0].mxu0 %v149
    %v276 = vpop.f32.mrb[0].mxu0
    %v277 = vadd.f32 0.0, %v276
    %v278 = vpop.f32.mrb[0].mxu0
    %279 = vmatprep.mubr.f32.mxu0 0.0
    %280 = vmatmul.mubr.f32.gmra.mrb[0].mxu0 %v152
    %v281 = vpop.f32.mrb[0].mxu0
    %v282 = vadd.f32 0.0, %v281
    %v283 = vpop.f32.mrb[0].mxu0
    %284 = vmatprep.mubr.f32.mxu0 0.0
    %285 = vmatmul.mubr.f32.gmra.mrb[0].mxu0 %v155
    %v286 = vpop.f32.mrb[0].mxu0
    %v287 = vadd.f32 0.0, %v286
    %v288 = vpop.f32.mrb[0].mxu0
    %289 = vmatprep.mubr.f32.mxu0 0.0
    %290 = vmatmul.mubr.f32.gmra.mrb[0].mxu0 %v158
    %v291 = vpop.f32.mrb[0].mxu0
    %v292 = vadd.f32 0.0, %v291
    %v293 = vpop.f32.mrb[0].mxu0
    %294 = vmatprep.mubr.f32.mxu0 0.0
    %295 = vmatmul.mubr.f32.gmra.mrb[0].mxu0 %v161
    %v296 = vpop.f32.mrb[0].mxu0
    %v297 = vadd.f32 0.0, %v296
    %v298 = vpop.f32.mrb[0].mxu0
    %299 = vmatprep.mubr.f32.mxu0 0.0
    %300 = vmatmul.mubr.f32.gmra.mrb[0].mxu0 %v164
    %v301 = vpop.f32.mrb[0].mxu0
    %v302 = vadd.f32 0.0, %v301
    %v303 = vpop.f32.mrb[0].mxu0
    %304 = vmatprep.mubr.f32.mxu0 0.0
    %305 = vmatmul.mubr.f32.gmra.mrb[0].mxu0 %v167
    %v306 = vpop.f32.mrb[0].mxu0
    %v307 = vadd.f32 0.0, %v306
    %v308 = vpop.f32.mrb[0].mxu0
    %309 = vmatprep.mubr.f32.mxu0 0.0
    %310 = vmatmul.mubr.f32.gmra.mrb[0].mxu0 %v170
    %v311 = vpop.f32.mrb[0].mxu0
    %v312 = vadd.f32 0.0, %v311
    %v313 = vpop.f32.mrb[0].mxu0
    %314 = vmatprep.mubr.f32.mxu0 0.0
    %315 = vmatmul.mubr.f32.gmra.mrb[0].mxu0 %v173
    %v316 = vpop.f32.mrb[0].mxu0
    %v317 = vadd.f32 0.0, %v316
    %v318 = vpop.f32.mrb[0].mxu0
    %319 = vdwg.mxu0
    %v320 = vadd.f32 %v89, %v242
    %v321 = vadd.f32 %v90, %v247
    %v322 = vadd.f32 %v91, %v252
    %v323 = vadd.f32 %v92, %v257
    %v324 = vadd.f32 %v93, %v262
    %v325 = vadd.f32 %v94, %v267
    %v326 = vadd.f32 %v95, %v272
    %v327 = vadd.f32 %v96, %v277
    %v328 = vadd.f32 %v97, %v282
    %v329 = vadd.f32 %v98, %v287
    %v330 = vadd.f32 %v99, %v292
    %v331 = vadd.f32 %v100, %v297
    %v332 = vadd.f32 %v101, %v302
    %v333 = vadd.f32 %v102, %v307
    %v334 = vadd.f32 %v103, %v312
    %v335 = vadd.f32 %v104, %v317
    %336 = vst [vmem:[#allocation2] sm:$0xff] %v320
    %337 = vst [vmem:[#allocation2 + $0x8] sm:$0xff] %v321
    %338 = vst [vmem:[#allocation2 + $0x10] sm:$0xff] %v322
    %339 = vst [vmem:[#allocation2 + $0x18] sm:$0xff] %v323
    %340 = vst [vmem:[#allocation2 + $0x20] sm:$0xff] %v324
    %341 = vst [vmem:[#allocation2 + $0x28] sm:$0xff] %v325
    %342 = vst [vmem:[#allocation2 + $0x30] sm:$0xff] %v326
    %343 = vst [vmem:[#allocation2 + $0x38] sm:$0xff] %v327
    %344 = vst [vmem:[#allocation2 + $0x40] sm:$0xff] %v328
    %345 = vst [vmem:[#allocation2 + $0x48] sm:$0xff] %v329
    %346 = vst [vmem:[#allocation2 + $0x50] sm:$0xff] %v330
    %347 = vst [vmem:[#allocation2 + $0x58] sm:$0xff] %v331
    %348 = vst [vmem:[#allocation2 + $0x60] sm:$0xff] %v332
    %349 = vst [vmem:[#allocation2 + $0x68] sm:$0xff] %v333
    %350 = vst [vmem:[#allocation2 + $0x70] sm:$0xff] %v334
    %351 = vst [vmem:[#allocation2 + $0x78] sm:$0xff] %v335
    // Predicated region
    $region38: #{tpu_custom_call.1} parent=1 // pred_check
      %p352 = pneg %p69
    $region39: #{tpu_custom_call.1} parent=1 // pred_check_branch
      %354 = sbr.rel (%p352) target = $region41
    $region40: #{tpu_custom_call.1} parent=1 // pred_region
      %v355 = vld [vmem:[#allocation2] sm:$0xff]
      %v356 = vld [vmem:[#allocation2 + $0x8] sm:$0xff]
      %v357 = vld [vmem:[#allocation2 + $0x10] sm:$0xff]
      %v358 = vld [vmem:[#allocation2 + $0x18] sm:$0xff]
      %v359 = vld [vmem:[#allocation2 + $0x20] sm:$0xff]
      %v360 = vld [vmem:[#allocation2 + $0x28] sm:$0xff]
      %v361 = vld [vmem:[#allocation2 + $0x30] sm:$0xff]
      %v362 = vld [vmem:[#allocation2 + $0x38] sm:$0xff]
      %v363 = vld [vmem:[#allocation2 + $0x40] sm:$0xff]
      %v364 = vld [vmem:[#allocation2 + $0x48] sm:$0xff]
      %v365 = vld [vmem:[#allocation2 + $0x50] sm:$0xff]
      %v366 = vld [vmem:[#allocation2 + $0x58] sm:$0xff]
      %v367 = vld [vmem:[#allocation2 + $0x60] sm:$0xff]
      %v368 = vld [vmem:[#allocation2 + $0x68] sm:$0xff]
      %v369 = vld [vmem:[#allocation2 + $0x70] sm:$0xff]
      %v370 = vld [vmem:[#allocation2 + $0x78] sm:$0xff]
      %v371 = vld [vmem:[#allocation8] sm:$0x1]
      %v373 = vlaneseq
      %v374 = vshrl.u32 %v373, 7
      %v375 = vsub.s32 0, %v374
      %v376 = vrot.slane %v371, %v375
      %v378 = vmul.f32 %v355, %v376
      %v379 = vmul.f32 %v356, %v376
      %v380 = vmul.f32 %v357, %v376
      %v381 = vmul.f32 %v358, %v376
      %v382 = vmul.f32 %v359, %v376
      %v383 = vmul.f32 %v360, %v376
      %v384 = vmul.f32 %v361, %v376
      %v385 = vmul.f32 %v362, %v376
      %v386 = vmul.f32 %v363, %v376
      %v387 = vmul.f32 %v364, %v376
      %v388 = vmul.f32 %v365, %v376
      %v389 = vmul.f32 %v366, %v376
      %v390 = vmul.f32 %v367, %v376
      %v391 = vmul.f32 %v368, %v376
      %v392 = vmul.f32 %v369, %v376
      %v393 = vmul.f32 %v370, %v376
      %v394 = vld [vmem:[#allocation9] sm:$0x1]
      %v396 = vlaneseq
      %v397 = vshrl.u32 %v396, 7
      %v398 = vsub.s32 0, %v397
      %v399 = vrot.slane %v394, %v398
      %v401 = vadd.f32 %v378, %v399
      %v402 = vadd.f32 %v379, %v399
      %v403 = vadd.f32 %v380, %v399
      %v404 = vadd.f32 %v381, %v399
      %v405 = vadd.f32 %v382, %v399
      %v406 = vadd.f32 %v383, %v399
      %v407 = vadd.f32 %v384, %v399
      %v408 = vadd.f32 %v385, %v399
      %v409 = vadd.f32 %v386, %v399
      %v410 = vadd.f32 %v387, %v399
      %v411 = vadd.f32 %v388, %v399
      %v412 = vadd.f32 %v389, %v399
      %v413 = vadd.f32 %v390, %v399
      %v414 = vadd.f32 %v391, %v399
      %v415 = vadd.f32 %v392, %v399
      %v416 = vadd.f32 %v393, %v399
      %v417 = vmax.f32 %v401, 0.0
      %v418 = vmax.f32 %v402, 0.0
      %v419 = vmax.f32 %v403, 0.0
      %v420 = vmax.f32 %v404, 0.0
      %v421 = vmax.f32 %v405, 0.0
      %v422 = vmax.f32 %v406, 0.0
      %v423 = vmax.f32 %v407, 0.0
      %v424 = vmax.f32 %v408, 0.0
      %v425 = vmax.f32 %v409, 0.0
      %v426 = vmax.f32 %v410, 0.0
      %v427 = vmax.f32 %v411, 0.0
      %v428 = vmax.f32 %v412, 0.0
      %v429 = vmax.f32 %v413, 0.0
      %v430 = vmax.f32 %v414, 0.0
      %v431 = vmax.f32 %v415, 0.0
      %v432 = vmax.f32 %v416, 0.0
      %433 = vst [vmem:[#allocation11] sm:$0xff] %v417
      %434 = vst [vmem:[#allocation11 + $0x8] sm:$0xff] %v418
      %435 = vst [vmem:[#allocation11 + $0x10] sm:$0xff] %v419
      %436 = vst [vmem:[#allocation11 + $0x18] sm:$0xff] %v420
      %437 = vst [vmem:[#allocation11 + $0x20] sm:$0xff] %v421
      %438 = vst [vmem:[#allocation11 + $0x28] sm:$0xff] %v422
      %439 = vst [vmem:[#allocation11 + $0x30] sm:$0xff] %v423
      %440 = vst [vmem:[#allocation11 + $0x38] sm:$0xff] %v424
      %441 = vst [vmem:[#allocation11 + $0x40] sm:$0xff] %v425
      %442 = vst [vmem:[#allocation11 + $0x48] sm:$0xff] %v426
      %443 = vst [vmem:[#allocation11 + $0x50] sm:$0xff] %v427
      %444 = vst [vmem:[#allocation11 + $0x58] sm:$0xff] %v428
      %445 = vst [vmem:[#allocation11 + $0x60] sm:$0xff] %v429
      %446 = vst [vmem:[#allocation11 + $0x68] sm:$0xff] %v430
      %447 = vst [vmem:[#allocation11 + $0x70] sm:$0xff] %v431
      %448 = vst [vmem:[#allocation11 + $0x78] sm:$0xff] %v432
    $region41: #{tpu_custom_call.1} parent=1 // pred_fallthru
      _
    // Predicated region
    $region42: #{tpu_custom_call.1} parent=1 // pred_check
      _
    $region43: #{tpu_custom_call.1} parent=1 // pred_check_branch
      %450 = sbr.rel (0) target = $region45
    $region44: #{tpu_custom_call.1} parent=1 // pred_region
      %s452 = ssub.s32 2048, 2048
      %453 = vsyncadd [#allocation5], %s452
      %s454 = sshll.u32 [#allocation11], 4
      %s455 = int_to_ptr.vmem [resolvable:$true] %s454
      %460 = dma.vmem_to_hbm [thread:$0]  %s455, 2048, %s4, [#allocation5], 128, 128, 8
    $region45: #{tpu_custom_call.1} parent=1 // pred_fallthru
      _
    // Predicated region
    $region46: #{tpu_custom_call.1} parent=1 // pred_check
      _
    $region47: #{tpu_custom_call.1} parent=1 // pred_check_branch
      %462 = sbr.rel (0) target = $region49
    $region48: #{tpu_custom_call.1} parent=1 // pred_region
      %463 = dma.done [#allocation5], 2048
    $region49: #{tpu_custom_call.1} parent=1 // pred_fallthru
      _
    %464 = vsyncpa [#allocation4], 1
    %465 = vsyncpa [#allocation7], 1
    %466 = vsyncpa [#allocation10], 1
    %467 = vsyncpa [#allocation5], 1

</llo_original>
